<compile_context>
chip_gen: v5e
topology: v5e:2x2
jax: 0.10.0
libtpu: 0.0.40
codegen_flags: <defaults>
</compile_context>

<pallas_src>
import jax
import jax.numpy as jnp
from jax import lax
from jax.experimental import pallas as pl
from jax.experimental.pallas import tpu as pltpu
import numpy as np

# ----------------------------- model configuration (small but structurally
# faithful to SWCnn's __init__) ------------------------------------------------
VOCAB = 30
WORD_EMB = 32          # word_embedding_size
TAG_NUM, TAG_EMB = 11, 16
POS_NUM, POS_EMB = 4, 16       # position_number=4 (raw features), position_embedding_size
DIR_NUM, DIR_EMB = 3, 8
EDGE_NUM, EDGE_EMB = 10, 16
TOK_EMB = 64           # token_embedding_size
DEP_EMB = 32           # dep_embedding_size
C1 = C2 = C3 = 16      # conv out channels
L1, L2, L3 = 1, 2, 3   # conv lengths
D = 2 * TOK_EMB + DEP_EMB          # conv kernel width (full feature width) = 160
NCH = C1 + C2 + C3                 # 48
NCONV = C1 + L2 * C2 + L3 * C3     # 96 fused conv output columns

RAW_COLS = 14                      # raw input columns streamed into the kernel
IN_LANES = 128                     # one-hot + position slab width (one lane tile)
PD_W = 2 * POS_EMB + DEP_EMB       # 64 = [pe1 | pe2 | dep]
CONV_W = 128                       # fused conv output padded to a full lane tile

# in-kernel one-hot / position lane offsets (disjoint segments, total <= 128)
I_W1 = 0
I_T1 = I_W1 + VOCAB                # 30
I_P1 = I_T1 + TAG_NUM              # 41
I_D = I_P1 + POS_NUM               # 45
I_E = I_D + DIR_NUM                # 48
I_W2 = I_E + EDGE_NUM              # 58
I_T2 = I_W2 + VOCAB                # 88
I_P2 = I_T2 + TAG_NUM              # 99
assert I_P2 + POS_NUM <= IN_LANES


# ----------------------------- Pallas kernel ---------------------------------
def swcnn_kernel(x_ref, wpd_ref, wtokx_ref, wtokpd_ref, wcvt_ref, wcvpd_ref,
                 out_ref):
    BB, S, _ = x_ref.shape
    R = BB * S
    xr = x_ref[...].reshape(R, RAW_COLS)                  # (R, 14) raw f32

    # Build the 128-lane one-hot + position slab in-registers (no HBM slab).
    lane = lax.broadcasted_iota(jnp.int32, (R, IN_LANES), 1)

    def onehot(col, off):
        idx = (xr[:, col:col + 1] + 0.5).astype(jnp.int32) + off   # (R, 1)
        return (lane == idx).astype(jnp.float32)

    feat = (onehot(0, I_W1) + onehot(1, I_T1) + onehot(6, I_D) + onehot(7, I_E)
            + onehot(8, I_W2) + onehot(9, I_T2))
    for j in range(POS_NUM):
        feat = feat + jnp.where(lane == I_P1 + j, xr[:, 2 + j:3 + j], 0.0)
        feat = feat + jnp.where(lane == I_P2 + j, xr[:, 10 + j:11 + j], 0.0)
    feat = feat.astype(jnp.bfloat16)                       # (R, 128) bf16

    def mm(a, b):
        return jnp.dot(a, b, preferred_element_type=jnp.float32)

    relu = lambda v: jnp.maximum(v, 0.0)

    # fused position + dep projection (embedding tables pre-folded into wpd)
    pd = relu(mm(feat, wpd_ref[...])).astype(jnp.bfloat16)            # (R, 64)
    # fused token projection for both entities (tables folded into wtokx)
    tok = relu(mm(feat, wtokx_ref[...])
               + mm(pd, wtokpd_ref[...])).astype(jnp.bfloat16)        # (R, 128)
    # fused conv1/conv2/conv3 matmul, output padded to 128 lanes
    y = mm(tok, wcvt_ref[...]) + mm(pd, wcvpd_ref[...])               # (R, 128) f32
    y = y.reshape(BB, S, CONV_W)

    # per-batch-element window sums (never cross batch boundaries)
    y1 = relu(y[:, :, 0:C1])                                              # (BB, S,   C1)
    o2 = C1
    y2 = relu(y[:, :S - 1, o2:o2 + C2] + y[:, 1:, o2 + C2:o2 + 2 * C2])    # (BB, S-1, C2)
    o3 = C1 + 2 * C2
    y3 = relu(y[:, :S - 2, o3:o3 + C3]
              + y[:, 1:S - 1, o3 + C3:o3 + 2 * C3]
              + y[:, 2:, o3 + 2 * C3:o3 + 3 * C3])                         # (BB, S-2, C3)

    # partial per-channel max over this batch block; final max done in wrapper
    m1 = jnp.max(jnp.max(y1, axis=1), axis=0, keepdims=True)   # (1, C1)
    m2 = jnp.max(jnp.max(y2, axis=1), axis=0, keepdims=True)   # (1, C2)
    m3 = jnp.max(jnp.max(y3, axis=1), axis=0, keepdims=True)   # (1, C3)
    pad = jnp.zeros((1, CONV_W - NCH), jnp.float32)
    out_ref[...] = jnp.concatenate([m1, m2, m3, pad], axis=1).reshape(1, 1, CONV_W)


# ----------------------------- weight folding ---------------------------------
def build_kernel_weights(p, dtype=jnp.bfloat16):
    """Fold the embedding tables and the PyTorch Linear/Conv weights into the
    bf16 matrices the kernel multiplies against (no gathers, no concats)."""
    f32 = jnp.float32
    wp_t = p["Wp"].T.astype(f32)                    # (4, 16)
    wtok_t = p["Wtok"].T.astype(f32)                # (64, 64)
    wdep_t = p["Wdep"].T.astype(f32)                # (24, 32)
    wt_w = wtok_t[:WORD_EMB]
    wt_t = wtok_t[WORD_EMB:WORD_EMB + TAG_EMB]
    wt_p = wtok_t[WORD_EMB + TAG_EMB:]
    wd_d = wdep_t[:DIR_EMB]
    wd_e = wdep_t[DIR_EMB:]

    # (1) one-hot slab (128) -> [pe1 | pe2 | dep] (64), tables folded
    wpd = jnp.zeros((IN_LANES, PD_W), f32)
    wpd = wpd.at[I_P1:I_P1 + POS_NUM, 0:POS_EMB].set(wp_t)
    wpd = wpd.at[I_P2:I_P2 + POS_NUM, POS_EMB:2 * POS_EMB].set(wp_t)
    wpd = wpd.at[I_D:I_D + DIR_NUM, 2 * POS_EMB:].set(p["dir"].astype(f32) @ wd_d)
    wpd = wpd.at[I_E:I_E + EDGE_NUM, 2 * POS_EMB:].set(p["edge"].astype(f32) @ wd_e)

    # (2) one-hot slab (128) -> [tok1 | tok2] (128), word/tag tables folded
    wtokx = jnp.zeros((IN_LANES, 2 * TOK_EMB), f32)
    wtokx = wtokx.at[I_W1:I_W1 + VOCAB, :TOK_EMB].set(p["w2v"].astype(f32) @ wt_w)
    wtokx = wtokx.at[I_T1:I_T1 + TAG_NUM, :TOK_EMB].set(p["tag"].astype(f32) @ wt_t)
    wtokx = wtokx.at[I_W2:I_W2 + VOCAB, TOK_EMB:].set(p["w2v"].astype(f32) @ wt_w)
    wtokx = wtokx.at[I_T2:I_T2 + TAG_NUM, TOK_EMB:].set(p["tag"].astype(f32) @ wt_t)

    # (3) [pe1 | pe2 | dep] (64) -> [tok1 | tok2] (128), position part only
    wtokpd = jnp.zeros((PD_W, 2 * TOK_EMB), f32)
    wtokpd = wtokpd.at[0:POS_EMB, :TOK_EMB].set(wt_p)
    wtokpd = wtokpd.at[POS_EMB:2 * POS_EMB, TOK_EMB:].set(wt_p)

    # (4) fused conv weight: Wbig = [W1 | W2a | W2b | W3a | W3b | W3c]  (160, 96)
    w1 = p["W1"][:, 0, 0, :].T
    w2a = p["W2"][:, 0, 0, :].T
    w2b = p["W2"][:, 0, 1, :].T
    w3a = p["W3"][:, 0, 0, :].T
    w3b = p["W3"][:, 0, 1, :].T
    w3c = p["W3"][:, 0, 2, :].T
    wbig = jnp.concatenate([w1, w2a, w2b, w3a, w3b, w3c], axis=1).astype(f32)
    # split along feat = [tok1(0:64) | dep(64:96) | tok2(96:160)], pad N 96->128
    wcvt = jnp.zeros((2 * TOK_EMB, CONV_W), f32)
    wcvt = wcvt.at[:, :NCONV].set(
        jnp.concatenate([wbig[:TOK_EMB], wbig[TOK_EMB + DEP_EMB:]], axis=0))
    wcvpd = jnp.zeros((PD_W, CONV_W), f32)
    wcvpd = wcvpd.at[2 * POS_EMB:, :NCONV].set(wbig[TOK_EMB:TOK_EMB + DEP_EMB])

    return tuple(w.astype(dtype) for w in (wpd, wtokx, wtokpd, wcvt, wcvpd))


# ----------------------------- wrapper ----------------------------------------
def swcnn_forward(x, params, *, max_rows_per_block=4096):
    """x: (B, S, 14) float32 — cols 0,1,6,7,8,9 hold integer ids stored as floats."""
    B, S, C = x.shape
    assert C == RAW_COLS
    assert S >= 3, "conv3 (length 3) requires S >= 3 (same limit as the reference)"

    wpd, wtokx, wtokpd, wcvt, wcvpd = build_kernel_weights(params)

    # batch-block selection: big blocks via cdiv + padding; keep nb >= 2 when
    # possible so the "parallel" grid axis can use both v7x TensorCores.
    bb = max(1, min(B, max_rows_per_block // S))
    if B >= 2:
        bb = min(bb, -(-B // 2))
    nb = -(-B // bb)
    pad_b = nb * bb - B
    x = x.astype(jnp.float32)
    if pad_b:
        # padded rows: out-of-range ids -> all-zero one-hot/pos slab -> all
        # downstream activations are exactly 0 -> contribute 0 to post-ReLU max.
        pad_row = jnp.zeros((RAW_COLS,), jnp.float32).at[
            jnp.array([0, 1, 6, 7, 8, 9])].set(-100000.0)
        x = jnp.concatenate(
            [x, jnp.broadcast_to(pad_row, (pad_b, S, RAW_COLS))], axis=0)

    whole = lambda b: (0, 0)
    partials = pl.pallas_call(
        swcnn_kernel,
        out_shape=jax.ShapeDtypeStruct((nb, 1, CONV_W), jnp.float32),
        grid_spec=pltpu.PrefetchScalarGridSpec(
            num_scalar_prefetch=0,
            grid=(nb,),
            in_specs=[
                pl.BlockSpec((bb, S, RAW_COLS), lambda b: (b, 0, 0)),
                pl.BlockSpec((IN_LANES, PD_W), whole),
                pl.BlockSpec((IN_LANES, 2 * TOK_EMB), whole),
                pl.BlockSpec((PD_W, 2 * TOK_EMB), whole),
                pl.BlockSpec((2 * TOK_EMB, CONV_W), whole),
                pl.BlockSpec((PD_W, CONV_W), whole),
            ],
            out_specs=pl.BlockSpec((1, 1, CONV_W), lambda b: (b, 0, 0)),
        ),
        compiler_params=pltpu.CompilerParams(
            dimension_semantics=("parallel",),
            vmem_limit_bytes=48 * 1024 * 1024),
    )(x, wpd, wtokx, wtokpd, wcvt, wcvpd)

    # tiny final reduction + dense(48->2) + softmax in plain JAX
    m = jnp.max(partials.reshape(nb, CONV_W), axis=0)[:NCH]          # (48,)
    logits = m @ params["Wd"].T                                      # (2,)
    return jax.nn.softmax(logits, axis=0)


# ----------------------------- pure-JAX f32 reference --------------------------
def swcnn_reference(x, p):
    idx = lambda c: x[:, :, c].astype(jnp.int32)
    relu = jax.nn.relu
    we1, tag1 = p["w2v"][idx(0)], p["tag"][idx(1)]
    pos1 = relu(x[:, :, 2:6] @ p["Wp"].T)
    dire, edge = p["dir"][idx(6)], p["edge"][idx(7)]
    we2, tag2 = p["w2v"][idx(8)], p["tag"][idx(9)]
    pos2 = relu(x[:, :, 10:14] @ p["Wp"].T)
    tok1 = relu(jnp.concatenate([we1, tag1, pos1], -1) @ p["Wtok"].T)
    tok2 = relu(jnp.concatenate([we2, tag2, pos2], -1) @ p["Wtok"].T)
    dep = relu(jnp.concatenate([dire, edge], -1) @ p["Wdep"].T)
    feat = jnp.concatenate([tok1, dep, tok2], -1)        # (B, S, D)

    def conv_max(w, L):
        C = w.shape[0]
        S = feat.shape[1]
        win = jnp.concatenate([feat[:, l:S - L + 1 + l, :] for l in range(L)], -1)
        y = relu(win @ w.reshape(C, -1).T)               # (B, S-L+1, C)
        return jnp.max(y, axis=(0, 1))                   # (C,)

    m = jnp.concatenate([conv_max(p["W1"], L1),
                         conv_max(p["W2"], L2),
                         conv_max(p["W3"], L3)])
    logits = m @ p["Wd"].T
    return jax.nn.softmax(logits, axis=0)


# ----------------------------- parameters / inputs ------------------------------
def init_params(key):
    ks = jax.random.split(key, 10)
    scale = 0.1
    tag = scale * jax.random.normal(ks[1], (TAG_NUM, TAG_EMB), jnp.float32)
    dire = scale * jax.random.normal(ks[2], (DIR_NUM, DIR_EMB), jnp.float32)
    edge = scale * jax.random.normal(ks[3], (EDGE_NUM, EDGE_EMB), jnp.float32)
    # padding_idx=0 rows zeroed (mirrors nn.Embedding(..., padding_idx=0) init)
    tag = tag.at[0].set(0.0)
    dire = dire.at[0].set(0.0)
    edge = edge.at[0].set(0.0)
    return {
        "w2v": scale * jax.random.normal(ks[0], (VOCAB, WORD_EMB), jnp.float32),
        "tag": tag, "dir": dire, "edge": edge,
        "Wp": scale * jax.random.normal(ks[4], (POS_EMB, 4), jnp.float32),
        "Wtok": scale * jax.random.normal(
            ks[5], (TOK_EMB, WORD_EMB + TAG_EMB + POS_EMB), jnp.float32),
        "Wdep": scale * jax.random.normal(
            ks[6], (DEP_EMB, DIR_EMB + EDGE_EMB), jnp.float32),
        "W1": scale * jax.random.normal(ks[7], (C1, 1, L1, D), jnp.float32),
        "W2": scale * jax.random.normal(ks[8], (C2, 1, L2, D), jnp.float32),
        "W3": scale * jax.random.normal(ks[9], (C3, 1, L3, D), jnp.float32),
        "Wd": scale * jax.random.normal(jax.random.fold_in(key, 99),
                                        (2, NCH), jnp.float32),
    }


def make_input(key, B=2, S=8):
    ks = jax.random.split(key, 8)
    w1 = jax.random.randint(ks[0], (B, S, 1), 0, VOCAB).astype(jnp.float32)
    t1 = jax.random.randint(ks[1], (B, S, 1), 0, TAG_NUM).astype(jnp.float32)
    p1 = jax.random.normal(ks[2], (B, S, 4), jnp.float32)
    dr = jax.random.randint(ks[3], (B, S, 1), 0, DIR_NUM).astype(jnp.float32)
    ed = jax.random.randint(ks[4], (B, S, 1), 0, EDGE_NUM).astype(jnp.float32)
    w2 = jax.random.randint(ks[5], (B, S, 1), 0, VOCAB).astype(jnp.float32)
    t2 = jax.random.randint(ks[6], (B, S, 1), 0, TAG_NUM).astype(jnp.float32)
    p2 = jax.random.normal(ks[7], (B, S, 4), jnp.float32)
    return jnp.concatenate([w1, t1, p1, dr, ed, w2, t2, p2], axis=-1)  # (B,S,14)


if __name__ == "__main__":
    key = jax.random.PRNGKey(0)
    pkey, xkey = jax.random.split(key)
    params = init_params(pkey)
    x = make_input(xkey, B=2, S=8)

    out = swcnn_forward(x, params)
    out = jax.block_until_ready(out)

    ref = jax.block_until_ready(swcnn_reference(x, params))
    # bf16 MXU path -> looser tolerance than the previous f32 kernel
    np.testing.assert_allclose(np.asarray(out), np.asarray(ref),
                               rtol=5e-2, atol=1e-2)
    print("KERNEL_OK")
</pallas_src>

<mosaic_0001>
module attributes {stable_mosaic.version = 11 : i64} {
  func.func @swcnn_kernel(%arg0: i32, %arg1: memref<1x8x14xf32, #tpu.memory_space<vmem>>, %arg2: memref<128x64xbf16, #tpu.memory_space<vmem>>, %arg3: memref<128x128xbf16, #tpu.memory_space<vmem>>, %arg4: memref<64x128xbf16, #tpu.memory_space<vmem>>, %arg5: memref<128x128xbf16, #tpu.memory_space<vmem>>, %arg6: memref<64x128xbf16, #tpu.memory_space<vmem>>, %arg7: memref<1x1x128xf32, #tpu.memory_space<vmem>>) attributes {dimension_semantics = [#tpu.dimension_semantics<parallel>], iteration_bounds = array<i64: 2>, scalar_prefetch = 0 : i64, scratch_operands = 0 : i64, tpu.core_type = #tpu.core_type<tc>, window_params = [{transform_indices = @transform_0, window_bounds = array<i64: 1, 8, 14>}, {pipeline_mode = #tpu.pipeline_mode<synchronous>, transform_indices = @transform_1, window_bounds = array<i64: 128, 64>}, {pipeline_mode = #tpu.pipeline_mode<synchronous>, transform_indices = @transform_2, window_bounds = array<i64: 128, 128>}, {pipeline_mode = #tpu.pipeline_mode<synchronous>, transform_indices = @transform_3, window_bounds = array<i64: 64, 128>}, {pipeline_mode = #tpu.pipeline_mode<synchronous>, transform_indices = @transform_4, window_bounds = array<i64: 128, 128>}, {pipeline_mode = #tpu.pipeline_mode<synchronous>, transform_indices = @transform_5, window_bounds = array<i64: 64, 128>}, {transform_indices = @transform_6, window_bounds = array<i64: 1, 1, 128>}]} {
    %c0 = arith.constant 0 : index
    %c0_0 = arith.constant 0 : index
    %c0_1 = arith.constant 0 : index
    %0 = vector.load %arg1[%c0, %c0_0, %c0_1] : memref<1x8x14xf32, #tpu.memory_space<vmem>>, vector<1x8x14xf32>
    %1 = vector.shape_cast %0 : vector<1x8x14xf32> to vector<8x14xf32>
    %2 = tpu.iota {dimensions = array<i32: 1>} : vector<8x128xi32>
    %3 = vector.extract_strided_slice %1 {offsets = [0, 0], sizes = [8, 1], strides = [1, 1]} : vector<8x14xf32> to vector<8x1xf32>
    %cst = arith.constant 5.000000e-01 : f32
    %4 = vector.broadcast %cst : f32 to vector<8x1xf32>
    %5 = arith.addf %3, %4 : vector<8x1xf32>
    %6 = arith.fptosi %5 : vector<8x1xf32> to vector<8x1xi32>
    %c0_i32 = arith.constant 0 : i32
    %7 = vector.broadcast %c0_i32 : i32 to vector<8x1xi32>
    %8 = arith.addi %6, %7 : vector<8x1xi32>
    %9 = vector.broadcast %8 : vector<8x1xi32> to vector<8x128xi32>
    %10 = arith.cmpi eq, %2, %9 : vector<8x128xi32>
    %11 = arith.extui %10 : vector<8x128xi1> to vector<8x128xi32>
    %12 = arith.sitofp %11 : vector<8x128xi32> to vector<8x128xf32>
    %13 = vector.extract_strided_slice %1 {offsets = [0, 1], sizes = [8, 1], strides = [1, 1]} : vector<8x14xf32> to vector<8x1xf32>
    %cst_2 = arith.constant 5.000000e-01 : f32
    %14 = vector.broadcast %cst_2 : f32 to vector<8x1xf32>
    %15 = arith.addf %13, %14 : vector<8x1xf32>
    %16 = arith.fptosi %15 : vector<8x1xf32> to vector<8x1xi32>
    %c30_i32 = arith.constant 30 : i32
    %17 = vector.broadcast %c30_i32 : i32 to vector<8x1xi32>
    %18 = arith.addi %16, %17 : vector<8x1xi32>
    %19 = vector.broadcast %18 : vector<8x1xi32> to vector<8x128xi32>
    %20 = arith.cmpi eq, %2, %19 : vector<8x128xi32>
    %21 = arith.extui %20 : vector<8x128xi1> to vector<8x128xi32>
    %22 = arith.sitofp %21 : vector<8x128xi32> to vector<8x128xf32>
    %23 = arith.addf %12, %22 : vector<8x128xf32>
    %24 = vector.extract_strided_slice %1 {offsets = [0, 6], sizes = [8, 1], strides = [1, 1]} : vector<8x14xf32> to vector<8x1xf32>
    %cst_3 = arith.constant 5.000000e-01 : f32
    %25 = vector.broadcast %cst_3 : f32 to vector<8x1xf32>
    %26 = arith.addf %24, %25 : vector<8x1xf32>
    %27 = arith.fptosi %26 : vector<8x1xf32> to vector<8x1xi32>
    %c45_i32 = arith.constant 45 : i32
    %28 = vector.broadcast %c45_i32 : i32 to vector<8x1xi32>
    %29 = arith.addi %27, %28 : vector<8x1xi32>
    %30 = vector.broadcast %29 : vector<8x1xi32> to vector<8x128xi32>
    %31 = arith.cmpi eq, %2, %30 : vector<8x128xi32>
    %32 = arith.extui %31 : vector<8x128xi1> to vector<8x128xi32>
    %33 = arith.sitofp %32 : vector<8x128xi32> to vector<8x128xf32>
    %34 = arith.addf %23, %33 : vector<8x128xf32>
    %35 = vector.extract_strided_slice %1 {offsets = [0, 7], sizes = [8, 1], strides = [1, 1]} : vector<8x14xf32> to vector<8x1xf32>
    %cst_4 = arith.constant 5.000000e-01 : f32
    %36 = vector.broadcast %cst_4 : f32 to vector<8x1xf32>
    %37 = arith.addf %35, %36 : vector<8x1xf32>
    %38 = arith.fptosi %37 : vector<8x1xf32> to vector<8x1xi32>
    %c48_i32 = arith.constant 48 : i32
    %39 = vector.broadcast %c48_i32 : i32 to vector<8x1xi32>
    %40 = arith.addi %38, %39 : vector<8x1xi32>
    %41 = vector.broadcast %40 : vector<8x1xi32> to vector<8x128xi32>
    %42 = arith.cmpi eq, %2, %41 : vector<8x128xi32>
    %43 = arith.extui %42 : vector<8x128xi1> to vector<8x128xi32>
    %44 = arith.sitofp %43 : vector<8x128xi32> to vector<8x128xf32>
    %45 = arith.addf %34, %44 : vector<8x128xf32>
    %46 = vector.extract_strided_slice %1 {offsets = [0, 8], sizes = [8, 1], strides = [1, 1]} : vector<8x14xf32> to vector<8x1xf32>
    %cst_5 = arith.constant 5.000000e-01 : f32
    %47 = vector.broadcast %cst_5 : f32 to vector<8x1xf32>
    %48 = arith.addf %46, %47 : vector<8x1xf32>
    %49 = arith.fptosi %48 : vector<8x1xf32> to vector<8x1xi32>
    %c58_i32 = arith.constant 58 : i32
    %50 = vector.broadcast %c58_i32 : i32 to vector<8x1xi32>
    %51 = arith.addi %49, %50 : vector<8x1xi32>
    %52 = vector.broadcast %51 : vector<8x1xi32> to vector<8x128xi32>
    %53 = arith.cmpi eq, %2, %52 : vector<8x128xi32>
    %54 = arith.extui %53 : vector<8x128xi1> to vector<8x128xi32>
    %55 = arith.sitofp %54 : vector<8x128xi32> to vector<8x128xf32>
    %56 = arith.addf %45, %55 : vector<8x128xf32>
    %57 = vector.extract_strided_slice %1 {offsets = [0, 9], sizes = [8, 1], strides = [1, 1]} : vector<8x14xf32> to vector<8x1xf32>
    %cst_6 = arith.constant 5.000000e-01 : f32
    %58 = vector.broadcast %cst_6 : f32 to vector<8x1xf32>
    %59 = arith.addf %57, %58 : vector<8x1xf32>
    %60 = arith.fptosi %59 : vector<8x1xf32> to vector<8x1xi32>
    %c88_i32 = arith.constant 88 : i32
    %61 = vector.broadcast %c88_i32 : i32 to vector<8x1xi32>
    %62 = arith.addi %60, %61 : vector<8x1xi32>
    %63 = vector.broadcast %62 : vector<8x1xi32> to vector<8x128xi32>
    %64 = arith.cmpi eq, %2, %63 : vector<8x128xi32>
    %65 = arith.extui %64 : vector<8x128xi1> to vector<8x128xi32>
    %66 = arith.sitofp %65 : vector<8x128xi32> to vector<8x128xf32>
    %67 = arith.addf %56, %66 : vector<8x128xf32>
    %c41_i32 = arith.constant 41 : i32
    %68 = vector.broadcast %c41_i32 : i32 to vector<8x128xi32>
    %69 = arith.cmpi eq, %2, %68 : vector<8x128xi32>
    %70 = vector.extract_strided_slice %1 {offsets = [0, 2], sizes = [8, 1], strides = [1, 1]} : vector<8x14xf32> to vector<8x1xf32>
    %cst_7 = arith.constant 0.000000e+00 : f32
    %71 = vector.shape_cast %70 : vector<8x1xf32> to vector<8x1xf32>
    %72 = vector.broadcast %71 : vector<8x1xf32> to vector<8x128xf32>
    %73 = vector.broadcast %cst_7 : f32 to vector<8x128xf32>
    %74 = arith.select %69, %72, %73 : vector<8x128xi1>, vector<8x128xf32>
    %75 = arith.addf %67, %74 : vector<8x128xf32>
    %c99_i32 = arith.constant 99 : i32
    %76 = vector.broadcast %c99_i32 : i32 to vector<8x128xi32>
    %77 = arith.cmpi eq, %2, %76 : vector<8x128xi32>
    %78 = vector.extract_strided_slice %1 {offsets = [0, 10], sizes = [8, 1], strides = [1, 1]} : vector<8x14xf32> to vector<8x1xf32>
    %cst_8 = arith.constant 0.000000e+00 : f32
    %79 = vector.shape_cast %78 : vector<8x1xf32> to vector<8x1xf32>
    %80 = vector.broadcast %79 : vector<8x1xf32> to vector<8x128xf32>
    %81 = vector.broadcast %cst_8 : f32 to vector<8x128xf32>
    %82 = arith.select %77, %80, %81 : vector<8x128xi1>, vector<8x128xf32>
    %83 = arith.addf %75, %82 : vector<8x128xf32>
    %c42_i32 = arith.constant 42 : i32
    %84 = vector.broadcast %c42_i32 : i32 to vector<8x128xi32>
    %85 = arith.cmpi eq, %2, %84 : vector<8x128xi32>
    %86 = vector.extract_strided_slice %1 {offsets = [0, 3], sizes = [8, 1], strides = [1, 1]} : vector<8x14xf32> to vector<8x1xf32>
    %cst_9 = arith.constant 0.000000e+00 : f32
    %87 = vector.shape_cast %86 : vector<8x1xf32> to vector<8x1xf32>
    %88 = vector.broadcast %87 : vector<8x1xf32> to vector<8x128xf32>
    %89 = vector.broadcast %cst_9 : f32 to vector<8x128xf32>
    %90 = arith.select %85, %88, %89 : vector<8x128xi1>, vector<8x128xf32>
    %91 = arith.addf %83, %90 : vector<8x128xf32>
    %c100_i32 = arith.constant 100 : i32
    %92 = vector.broadcast %c100_i32 : i32 to vector<8x128xi32>
    %93 = arith.cmpi eq, %2, %92 : vector<8x128xi32>
    %94 = vector.extract_strided_slice %1 {offsets = [0, 11], sizes = [8, 1], strides = [1, 1]} : vector<8x14xf32> to vector<8x1xf32>
    %cst_10 = arith.constant 0.000000e+00 : f32
    %95 = vector.shape_cast %94 : vector<8x1xf32> to vector<8x1xf32>
    %96 = vector.broadcast %95 : vector<8x1xf32> to vector<8x128xf32>
    %97 = vector.broadcast %cst_10 : f32 to vector<8x128xf32>
    %98 = arith.select %93, %96, %97 : vector<8x128xi1>, vector<8x128xf32>
    %99 = arith.addf %91, %98 : vector<8x128xf32>
    %c43_i32 = arith.constant 43 : i32
    %100 = vector.broadcast %c43_i32 : i32 to vector<8x128xi32>
    %101 = arith.cmpi eq, %2, %100 : vector<8x128xi32>
    %102 = vector.extract_strided_slice %1 {offsets = [0, 4], sizes = [8, 1], strides = [1, 1]} : vector<8x14xf32> to vector<8x1xf32>
    %cst_11 = arith.constant 0.000000e+00 : f32
    %103 = vector.shape_cast %102 : vector<8x1xf32> to vector<8x1xf32>
    %104 = vector.broadcast %103 : vector<8x1xf32> to vector<8x128xf32>
    %105 = vector.broadcast %cst_11 : f32 to vector<8x128xf32>
    %106 = arith.select %101, %104, %105 : vector<8x128xi1>, vector<8x128xf32>
    %107 = arith.addf %99, %106 : vector<8x128xf32>
    %c101_i32 = arith.constant 101 : i32
    %108 = vector.broadcast %c101_i32 : i32 to vector<8x128xi32>
    %109 = arith.cmpi eq, %2, %108 : vector<8x128xi32>
    %110 = vector.extract_strided_slice %1 {offsets = [0, 12], sizes = [8, 1], strides = [1, 1]} : vector<8x14xf32> to vector<8x1xf32>
    %cst_12 = arith.constant 0.000000e+00 : f32
    %111 = vector.shape_cast %110 : vector<8x1xf32> to vector<8x1xf32>
    %112 = vector.broadcast %111 : vector<8x1xf32> to vector<8x128xf32>
    %113 = vector.broadcast %cst_12 : f32 to vector<8x128xf32>
    %114 = arith.select %109, %112, %113 : vector<8x128xi1>, vector<8x128xf32>
    %115 = arith.addf %107, %114 : vector<8x128xf32>
    %c44_i32 = arith.constant 44 : i32
    %116 = vector.broadcast %c44_i32 : i32 to vector<8x128xi32>
    %117 = arith.cmpi eq, %2, %116 : vector<8x128xi32>
    %118 = vector.extract_strided_slice %1 {offsets = [0, 5], sizes = [8, 1], strides = [1, 1]} : vector<8x14xf32> to vector<8x1xf32>
    %cst_13 = arith.constant 0.000000e+00 : f32
    %119 = vector.shape_cast %118 : vector<8x1xf32> to vector<8x1xf32>
    %120 = vector.broadcast %119 : vector<8x1xf32> to vector<8x128xf32>
    %121 = vector.broadcast %cst_13 : f32 to vector<8x128xf32>
    %122 = arith.select %117, %120, %121 : vector<8x128xi1>, vector<8x128xf32>
    %123 = arith.addf %115, %122 : vector<8x128xf32>
    %c102_i32 = arith.constant 102 : i32
    %124 = vector.broadcast %c102_i32 : i32 to vector<8x128xi32>
    %125 = arith.cmpi eq, %2, %124 : vector<8x128xi32>
    %126 = vector.extract_strided_slice %1 {offsets = [0, 13], sizes = [8, 1], strides = [1, 1]} : vector<8x14xf32> to vector<8x1xf32>
    %cst_14 = arith.constant 0.000000e+00 : f32
    %127 = vector.shape_cast %126 : vector<8x1xf32> to vector<8x1xf32>
    %128 = vector.broadcast %127 : vector<8x1xf32> to vector<8x128xf32>
    %129 = vector.broadcast %cst_14 : f32 to vector<8x128xf32>
    %130 = arith.select %125, %128, %129 : vector<8x128xi1>, vector<8x128xf32>
    %131 = arith.addf %123, %130 : vector<8x128xf32>
    %132 = arith.truncf %131 : vector<8x128xf32> to vector<8x128xbf16>
    %c0_15 = arith.constant 0 : index
    %c0_16 = arith.constant 0 : index
    %133 = vector.load %arg2[%c0_15, %c0_16] : memref<128x64xbf16, #tpu.memory_space<vmem>>, vector<128x64xbf16>
    %cst_17 = arith.constant dense<0.000000e+00> : vector<8x64xf32>
    %134 = tpu.matmul %132, %133, %cst_17 {dimension_numbers = #tpu.dot_dimension_numbers<[1], [0], [0], [1], [0, 0, 1, 1], [], []>} : vector<8x128xbf16>, vector<128x64xbf16>, vector<8x64xf32> -> vector<8x64xf32>
    %cst_18 = arith.constant 0.000000e+00 : f32
    %135 = vector.broadcast %cst_18 : f32 to vector<8x64xf32>
    %136 = arith.maximumf %134, %135 : vector<8x64xf32>
    %137 = arith.truncf %136 : vector<8x64xf32> to vector<8x64xbf16>
    %c0_19 = arith.constant 0 : index
    %c0_20 = arith.constant 0 : index
    %138 = vector.load %arg3[%c0_19, %c0_20] : memref<128x128xbf16, #tpu.memory_space<vmem>>, vector<128x128xbf16>
    %cst_21 = arith.constant dense<0.000000e+00> : vector<8x128xf32>
    %139 = tpu.matmul %132, %138, %cst_21 {dimension_numbers = #tpu.dot_dimension_numbers<[1], [0], [0], [1], [0, 0, 1, 1], [], []>} : vector<8x128xbf16>, vector<128x128xbf16>, vector<8x128xf32> -> vector<8x128xf32>
    %c0_22 = arith.constant 0 : index
    %c0_23 = arith.constant 0 : index
    %140 = vector.load %arg4[%c0_22, %c0_23] : memref<64x128xbf16, #tpu.memory_space<vmem>>, vector<64x128xbf16>
    %cst_24 = arith.constant dense<0.000000e+00> : vector<8x128xf32>
    %141 = tpu.matmul %137, %140, %cst_24 {dimension_numbers = #tpu.dot_dimension_numbers<[1], [0], [0], [1], [0, 0, 1, 1], [], []>} : vector<8x64xbf16>, vector<64x128xbf16>, vector<8x128xf32> -> vector<8x128xf32>
    %142 = arith.addf %139, %141 : vector<8x128xf32>
    %cst_25 = arith.constant 0.000000e+00 : f32
    %143 = vector.broadcast %cst_25 : f32 to vector<8x128xf32>
    %144 = arith.maximumf %142, %143 : vector<8x128xf32>
    %145 = arith.truncf %144 : vector<8x128xf32> to vector<8x128xbf16>
    %c0_26 = arith.constant 0 : index
    %c0_27 = arith.constant 0 : index
    %146 = vector.load %arg5[%c0_26, %c0_27] : memref<128x128xbf16, #tpu.memory_space<vmem>>, vector<128x128xbf16>
    %cst_28 = arith.constant dense<0.000000e+00> : vector<8x128xf32>
    %147 = tpu.matmul %145, %146, %cst_28 {dimension_numbers = #tpu.dot_dimension_numbers<[1], [0], [0], [1], [0, 0, 1, 1], [], []>} : vector<8x128xbf16>, vector<128x128xbf16>, vector<8x128xf32> -> vector<8x128xf32>
    %c0_29 = arith.constant 0 : index
    %c0_30 = arith.constant 0 : index
    %148 = vector.load %arg6[%c0_29, %c0_30] : memref<64x128xbf16, #tpu.memory_space<vmem>>, vector<64x128xbf16>
    %cst_31 = arith.constant dense<0.000000e+00> : vector<8x128xf32>
    %149 = tpu.matmul %137, %148, %cst_31 {dimension_numbers = #tpu.dot_dimension_numbers<[1], [0], [0], [1], [0, 0, 1, 1], [], []>} : vector<8x64xbf16>, vector<64x128xbf16>, vector<8x128xf32> -> vector<8x128xf32>
    %150 = arith.addf %147, %149 : vector<8x128xf32>
    %151 = vector.shape_cast %150 : vector<8x128xf32> to vector<1x8x128xf32>
    %152 = vector.extract_strided_slice %151 {offsets = [0, 0, 0], sizes = [1, 8, 16], strides = [1, 1, 1]} : vector<1x8x128xf32> to vector<1x8x16xf32>
    %cst_32 = arith.constant 0.000000e+00 : f32
    %153 = vector.broadcast %cst_32 : f32 to vector<1x8x16xf32>
    %154 = arith.maximumf %152, %153 : vector<1x8x16xf32>
    %155 = vector.extract_strided_slice %151 {offsets = [0, 0, 16], sizes = [1, 7, 16], strides = [1, 1, 1]} : vector<1x8x128xf32> to vector<1x7x16xf32>
    %156 = vector.extract_strided_slice %151 {offsets = [0, 1, 32], sizes = [1, 7, 16], strides = [1, 1, 1]} : vector<1x8x128xf32> to vector<1x7x16xf32>
    %157 = arith.addf %155, %156 : vector<1x7x16xf32>
    %cst_33 = arith.constant 0.000000e+00 : f32
    %158 = vector.broadcast %cst_33 : f32 to vector<1x7x16xf32>
    %159 = arith.maximumf %157, %158 : vector<1x7x16xf32>
    %160 = vector.extract_strided_slice %151 {offsets = [0, 0, 48], sizes = [1, 6, 16], strides = [1, 1, 1]} : vector<1x8x128xf32> to vector<1x6x16xf32>
    %161 = vector.extract_strided_slice %151 {offsets = [0, 1, 64], sizes = [1, 6, 16], strides = [1, 1, 1]} : vector<1x8x128xf32> to vector<1x6x16xf32>
    %162 = arith.addf %160, %161 : vector<1x6x16xf32>
    %163 = vector.extract_strided_slice %151 {offsets = [0, 2, 80], sizes = [1, 6, 16], strides = [1, 1, 1]} : vector<1x8x128xf32> to vector<1x6x16xf32>
    %164 = arith.addf %162, %163 : vector<1x6x16xf32>
    %cst_34 = arith.constant 0.000000e+00 : f32
    %165 = vector.broadcast %cst_34 : f32 to vector<1x6x16xf32>
    %166 = arith.maximumf %164, %165 : vector<1x6x16xf32>
    %cst_35 = arith.constant dense<0xFF800000> : vector<1x16xf32>
    %167 = vector.multi_reduction <maximumf>, %154, %cst_35 [1] : vector<1x8x16xf32> to vector<1x16xf32>
    %cst_36 = arith.constant dense<0xFF800000> : vector<16xf32>
    %168 = vector.multi_reduction <maximumf>, %167, %cst_36 [0] : vector<1x16xf32> to vector<16xf32>
    %169 = vector.shape_cast %168 : vector<16xf32> to vector<1x16xf32>
    %cst_37 = arith.constant dense<0xFF800000> : vector<1x16xf32>
    %170 = vector.multi_reduction <maximumf>, %159, %cst_37 [1] : vector<1x7x16xf32> to vector<1x16xf32>
    %cst_38 = arith.constant dense<0xFF800000> : vector<16xf32>
    %171 = vector.multi_reduction <maximumf>, %170, %cst_38 [0] : vector<1x16xf32> to vector<16xf32>
    %172 = vector.shape_cast %171 : vector<16xf32> to vector<1x16xf32>
    %cst_39 = arith.constant dense<0xFF800000> : vector<1x16xf32>
    %173 = vector.multi_reduction <maximumf>, %166, %cst_39 [1] : vector<1x6x16xf32> to vector<1x16xf32>
    %cst_40 = arith.constant dense<0xFF800000> : vector<16xf32>
    %174 = vector.multi_reduction <maximumf>, %173, %cst_40 [0] : vector<1x16xf32> to vector<16xf32>
    %175 = vector.shape_cast %174 : vector<16xf32> to vector<1x16xf32>
    %cst_41 = arith.constant 0.000000e+00 : f32
    %176 = vector.broadcast %cst_41 : f32 to vector<1x80xf32>
    %177 = tpu.concatenate %169, %172, %175, %176 in 1 : vector<1x16xf32>, vector<1x16xf32>, vector<1x16xf32>, vector<1x80xf32> -> vector<1x128xf32>
    %178 = vector.shape_cast %177 : vector<1x128xf32> to vector<1x1x128xf32>
    %c0_42 = arith.constant 0 : index
    %c0_43 = arith.constant 0 : index
    %c0_44 = arith.constant 0 : index
    %179 = vector.load %arg7[%c0_42, %c0_43, %c0_44] : memref<1x1x128xf32, #tpu.memory_space<vmem>>, vector<1x1x128xf32>
    tpu.vector_store %arg7[%c0_42, %c0_43, %c0_44], %178 {strides = array<i32>} : memref<1x1x128xf32, #tpu.memory_space<vmem>>, vector<1x1x128xf32>,
    return
  }
  func.func @transform_0(%arg0: i32) -> (i32, i32, i32) {
    %c0_i32 = arith.constant 0 : i32
    %c0_i32_0 = arith.constant 0 : i32
    %c0_i32_1 = arith.constant 0 : i32
    return %arg0, %c0_i32, %c0_i32_0 : i32, i32, i32
  }
  func.func @transform_1(%arg0: i32) -> (i32, i32) {
    %c0_i32 = arith.constant 0 : i32
    %c0_i32_0 = arith.constant 0 : i32
    %c0_i32_1 = arith.constant 0 : i32
    return %c0_i32, %c0_i32_0 : i32, i32
  }
  func.func @transform_2(%arg0: i32) -> (i32, i32) {
    %c0_i32 = arith.constant 0 : i32
    %c0_i32_0 = arith.constant 0 : i32
    %c0_i32_1 = arith.constant 0 : i32
    return %c0_i32, %c0_i32_0 : i32, i32
  }
  func.func @transform_3(%arg0: i32) -> (i32, i32) {
    %c0_i32 = arith.constant 0 : i32
    %c0_i32_0 = arith.constant 0 : i32
    %c0_i32_1 = arith.constant 0 : i32
    return %c0_i32, %c0_i32_0 : i32, i32
  }
  func.func @transform_4(%arg0: i32) -> (i32, i32) {
    %c0_i32 = arith.constant 0 : i32
    %c0_i32_0 = arith.constant 0 : i32
    %c0_i32_1 = arith.constant 0 : i32
    return %c0_i32, %c0_i32_0 : i32, i32
  }
  func.func @transform_5(%arg0: i32) -> (i32, i32) {
    %c0_i32 = arith.constant 0 : i32
    %c0_i32_0 = arith.constant 0 : i32
    %c0_i32_1 = arith.constant 0 : i32
    return %c0_i32, %c0_i32_0 : i32, i32
  }
  func.func @transform_6(%arg0: i32) -> (i32, i32, i32) {
    %c0_i32 = arith.constant 0 : i32
    %c0_i32_0 = arith.constant 0 : i32
    %c0_i32_1 = arith.constant 0 : i32
    return %arg0, %c0_i32, %c0_i32_0 : i32, i32, i32
  }
}

</mosaic_0001>

<llo_original>
// kernel: tpu_custom_call.1
$region0: #{tpu_custom_call.1}
  #allocation0 [shape = 'u32[]', space=smem, size = 0x4, offset = 0x4, fixed_abs, tag = 'smem constant byte address 0x4 - core index']
  #allocation1 [shape = 'u32[72,128]{1,0:T(1,128)}', space=vmem, size = 0x9000, scoped, tag = 'internal scratch']
  %s0 = inlined_call_operand.hbm [shape: f32[2,8,14], index: 0, kind: input, shape index: {}]
  %s1 = inlined_call_operand.vmem [shape: bf16[128,64], index: 1, kind: input, shape index: {}]
  %s2 = inlined_call_operand.vmem [shape: bf16[128,128], index: 2, kind: input, shape index: {}]
  %s3 = inlined_call_operand.vmem [shape: bf16[64,128], index: 3, kind: input, shape index: {}]
  %s4 = inlined_call_operand.hbm [shape: bf16[128,128], index: 4, kind: input, shape index: {}]
  %s5 = inlined_call_operand.hbm [shape: bf16[64,128], index: 5, kind: input, shape index: {}]
  %s6 = inlined_call_operand.hbm [shape: f32[2,1,128], index: 6, kind: output, shape index: {}]
  %s7 = sld [smem:[#allocation0]]
  $region69: #{tpu_custom_call.1} parent=0
    _
  %s9 = ssub.s32 1, %s7
  %s10 = scalar_select 0, %s9, %s7
  $region1: #{tpu_custom_call.1} parent=0
    #allocation2 [shape = 'u8[8192]{0}', space=vmem, size = 0x2000, scoped, tag = 'input window, operand 0']
    #allocation3 [shape = 's32[2]{0}', space=sflag, size = 0x8, scoped, tag = 'scoped memory for tpu_custom_call.1']
    #allocation4 [shape = 's32[2]{0}', space=sflag, size = 0x8, scoped, tag = 'scoped memory for tpu_custom_call.1']
    #allocation5 [shape = 'u8[32768]{0}', space=vmem, size = 0x8000, scoped, tag = 'input window, operand 4, single buffered']
    #allocation6 [shape = 's32[1]{0}', space=sflag, size = 0x4, scoped, tag = 'scoped memory for tpu_custom_call.1']
    #allocation7 [shape = 'u8[16384]{0}', space=vmem, size = 0x4000, scoped, tag = 'input window, operand 5, single buffered']
    #allocation8 [shape = 'u8[1024]{0}', space=vmem, size = 0x400, scoped, tag = 'output window, operand 0']
    %11 = vsyncpa [#allocation3], 0
    %s12 = scalar_lea.sflag [#allocation3], 1
    %13 = vsyncpa %s12, 0
    %14 = vsyncpa [#allocation6], 0
    %15 = vsyncpa [#allocation4], 0
    %s16 = scalar_lea.sflag [#allocation4], 1
    %17 = vsyncpa %s16, 0
    loop: start=0, step=1, limit=4
    $region2: #{tpu_custom_call.1} parent=1 // loop_pre_header
      _
    $region3: #{tpu_custom_call.1} parent=1 // loop_header
      %s19 = sphi 0, %s23
      %p20 = scmp.ge.s32.totalorder %s19, 4
      %s29 = sphi 0, %s31
      %s32 = sphi 0, %s29
      %s33 = sphi 0, %s32
      %s49 = sphi 0, %s33
      %s53 = sphi 0, %s53
      %s55 = sphi 0, %s53
      %s56 = sphi 0, %s55
      %s70 = sphi 0, %s56
      %s74 = sphi 0, %s74
      %s76 = sphi 0, %s74
      %s77 = sphi 0, %s76
      %s91 = sphi 0, %s77
      %s95 = sphi 0, %s95
      %s97 = sphi 0, %s95
      %s98 = sphi 0, %s97
      %s112 = sphi 0, %s98
      %s116 = sphi 0, %s116
      %s118 = sphi 0, %s116
      %s119 = sphi 0, %s118
      %s133 = sphi 0, %s119
      %s137 = sphi 0, %s137
      %s139 = sphi 0, %s137
      %s140 = sphi 0, %s139
      %s154 = sphi 0, %s140
      %s160 = sphi 0, %s162
      %s163 = sphi 0, %s160
      %s164 = sphi 0, %s163
      %s180 = sphi 0, %s164
    $region4: #{tpu_custom_call.1} parent=1 // loop_header_branch
      %22 = sbr.rel (%p20) target = $region8
    $region5: #{tpu_custom_call.1} parent=1 // loop_body
      %s24 = ssub.s32 %s19, 1
      %s25 = ssub.s32 %s19, 2
      %s26 = sadd.s32 %s19, 1
      %s27 = ssub.s32 %s19, %s26
      %p28 = scmp.eq.s32.totalorder %s27, 0
      %s30 = sadd.s32 %s29, 1
      %s31 = scalar_select %p28, %s29, %s30
      %p34 = pneg %p28
      %p35 = scmp.eq.s32.totalorder %s19, 1
      %p36 = por %p34, %p35
      %p37 = scmp.ne.s32.totalorder %s29, %s32
      %p38 = scmp.eq.s32.totalorder %s19, 0
      %p39 = por %p37, %p38
      %p40 = scmp.ne.s32.totalorder %s29, %s32
      %p41 = scmp.eq.s32.totalorder %s24, 1
      %p42 = por %p40, %p41
      %p43 = scmp.ne.s32.totalorder %s32, %s33
      %p44 = scmp.eq.s32.totalorder %s24, 0
      %p45 = por %p43, %p44
      %p46 = scmp.ne.s32.totalorder %s32, %s33
      %p47 = scmp.eq.s32.totalorder %s25, 1
      %p48 = por %p46, %p47
      %p50 = scmp.ne.s32.totalorder %s33, %s49
      %p51 = scmp.eq.s32.totalorder %s25, 0
      %p52 = por %p50, %p51
      %s54 = sadd.s32 %s53, 1
      %p57 = scmp.eq.s32.totalorder %s19, 1
      %p58 = scmp.ne.s32.totalorder %s53, %s55
      %p59 = scmp.eq.s32.totalorder %s19, 0
      %p60 = por %p58, %p59
      %p61 = scmp.ne.s32.totalorder %s53, %s55
      %p62 = scmp.eq.s32.totalorder %s24, 1
      %p63 = por %p61, %p62
      %p64 = scmp.ne.s32.totalorder %s55, %s56
      %p65 = scmp.eq.s32.totalorder %s24, 0
      %p66 = por %p64, %p65
      %p67 = scmp.ne.s32.totalorder %s55, %s56
      %p68 = scmp.eq.s32.totalorder %s25, 1
      %p69 = por %p67, %p68
      %p71 = scmp.ne.s32.totalorder %s56, %s70
      %p72 = scmp.eq.s32.totalorder %s25, 0
      %p73 = por %p71, %p72
      %s75 = sadd.s32 %s74, 1
      %p78 = scmp.eq.s32.totalorder %s19, 1
      %p79 = scmp.ne.s32.totalorder %s74, %s76
      %p80 = scmp.eq.s32.totalorder %s19, 0
      %p81 = por %p79, %p80
      %p82 = scmp.ne.s32.totalorder %s74, %s76
      %p83 = scmp.eq.s32.totalorder %s24, 1
      %p84 = por %p82, %p83
      %p85 = scmp.ne.s32.totalorder %s76, %s77
      %p86 = scmp.eq.s32.totalorder %s24, 0
      %p87 = por %p85, %p86
      %p88 = scmp.ne.s32.totalorder %s76, %s77
      %p89 = scmp.eq.s32.totalorder %s25, 1
      %p90 = por %p88, %p89
      %p92 = scmp.ne.s32.totalorder %s77, %s91
      %p93 = scmp.eq.s32.totalorder %s25, 0
      %p94 = por %p92, %p93
      %s96 = sadd.s32 %s95, 1
      %p99 = scmp.eq.s32.totalorder %s19, 1
      %p100 = scmp.ne.s32.totalorder %s95, %s97
      %p101 = scmp.eq.s32.totalorder %s19, 0
      %p102 = por %p100, %p101
      %p103 = scmp.ne.s32.totalorder %s95, %s97
      %p104 = scmp.eq.s32.totalorder %s24, 1
      %p105 = por %p103, %p104
      %p106 = scmp.ne.s32.totalorder %s97, %s98
      %p107 = scmp.eq.s32.totalorder %s24, 0
      %p108 = por %p106, %p107
      %p109 = scmp.ne.s32.totalorder %s97, %s98
      %p110 = scmp.eq.s32.totalorder %s25, 1
      %p111 = por %p109, %p110
      %p113 = scmp.ne.s32.totalorder %s98, %s112
      %p114 = scmp.eq.s32.totalorder %s25, 0
      %p115 = por %p113, %p114
      %s117 = sadd.s32 %s116, 1
      %p120 = scmp.eq.s32.totalorder %s19, 1
      %p121 = scmp.ne.s32.totalorder %s116, %s118
      %p122 = scmp.eq.s32.totalorder %s19, 0
      %p123 = por %p121, %p122
      %p124 = scmp.ne.s32.totalorder %s116, %s118
      %p125 = scmp.eq.s32.totalorder %s24, 1
      %p126 = por %p124, %p125
      %p127 = scmp.ne.s32.totalorder %s118, %s119
      %p128 = scmp.eq.s32.totalorder %s24, 0
      %p129 = por %p127, %p128
      %p130 = scmp.ne.s32.totalorder %s118, %s119
      %p131 = scmp.eq.s32.totalorder %s25, 1
      %p132 = por %p130, %p131
      %p134 = scmp.ne.s32.totalorder %s119, %s133
      %p135 = scmp.eq.s32.totalorder %s25, 0
      %p136 = por %p134, %p135
      %s138 = sadd.s32 %s137, 1
      %p141 = scmp.eq.s32.totalorder %s19, 1
      %p142 = scmp.ne.s32.totalorder %s137, %s139
      %p143 = scmp.eq.s32.totalorder %s19, 0
      %p144 = por %p142, %p143
      %p145 = scmp.ne.s32.totalorder %s137, %s139
      %p146 = scmp.eq.s32.totalorder %s24, 1
      %p147 = por %p145, %p146
      %p148 = scmp.ne.s32.totalorder %s139, %s140
      %p149 = scmp.eq.s32.totalorder %s24, 0
      %p150 = por %p148, %p149
      %p151 = scmp.ne.s32.totalorder %s139, %s140
      %p152 = scmp.eq.s32.totalorder %s25, 1
      %p153 = por %p151, %p152
      %p155 = scmp.ne.s32.totalorder %s140, %s154
      %p156 = scmp.eq.s32.totalorder %s25, 0
      %p157 = por %p155, %p156
      %s158 = ssub.s32 %s19, %s26
      %p159 = scmp.eq.s32.totalorder %s158, 0
      %s161 = sadd.s32 %s160, 1
      %s162 = scalar_select %p159, %s160, %s161
      %p165 = pneg %p159
      %p166 = scmp.eq.s32.totalorder %s19, 1
      %p167 = por %p165, %p166
      %p168 = scmp.ne.s32.totalorder %s160, %s163
      %p169 = scmp.eq.s32.totalorder %s19, 0
      %p170 = por %p168, %p169
      %p171 = scmp.ne.s32.totalorder %s160, %s163
      %p172 = scmp.eq.s32.totalorder %s24, 1
      %p173 = por %p171, %p172
      %p174 = scmp.ne.s32.totalorder %s163, %s164
      %p175 = scmp.eq.s32.totalorder %s24, 0
      %p176 = por %p174, %p175
      %p177 = scmp.ne.s32.totalorder %s163, %s164
      %p178 = scmp.eq.s32.totalorder %s25, 1
      %p179 = por %p177, %p178
      %p181 = scmp.ne.s32.totalorder %s164, %s180
      %p182 = scmp.eq.s32.totalorder %s25, 0
      %p183 = por %p181, %p182
      %p184 = scmp.le.s32.totalorder 1, %s19
      %p185 = scmp.lt.s32.totalorder %s19, 3
      %p186 = pnand %p184, %p185
      %p187 = pneg %p186
      // Predicated region
      $region9: #{tpu_custom_call.1} parent=5 // pred_check
        _
      $region10: #{tpu_custom_call.1} parent=5 // pred_check_branch
        %189 = sbr.rel (%p186) target = $region12
      $region11: #{tpu_custom_call.1} parent=5 // pred_region
        %s190 = ssub.s32 %s19, 1
        // Predicated region
        $region13: #{tpu_custom_call.1} parent=11 // pred_check
          %p191 = pneg %p66
        $region14: #{tpu_custom_call.1} parent=11 // pred_check_branch
          %193 = sbr.rel (%p191) target = $region16
        $region15: #{tpu_custom_call.1} parent=11 // pred_region
          _
        $region16: #{tpu_custom_call.1} parent=11 // pred_fallthru
          _
        // Predicated region
        $region17: #{tpu_custom_call.1} parent=11 // pred_check
          %p194 = pneg %p87
        $region18: #{tpu_custom_call.1} parent=11 // pred_check_branch
          %196 = sbr.rel (%p194) target = $region20
        $region19: #{tpu_custom_call.1} parent=11 // pred_region
          _
        $region20: #{tpu_custom_call.1} parent=11 // pred_fallthru
          _
        // Predicated region
        $region21: #{tpu_custom_call.1} parent=11 // pred_check
          %p197 = pneg %p108
        $region22: #{tpu_custom_call.1} parent=11 // pred_check_branch
          %199 = sbr.rel (%p197) target = $region24
        $region23: #{tpu_custom_call.1} parent=11 // pred_region
          _
        $region24: #{tpu_custom_call.1} parent=11 // pred_fallthru
          _
        // Predicated region
        $region25: #{tpu_custom_call.1} parent=11 // pred_check
          %p200 = pneg %p129
        $region26: #{tpu_custom_call.1} parent=11 // pred_check_branch
          %202 = sbr.rel (%p200) target = $region28
        $region27: #{tpu_custom_call.1} parent=11 // pred_region
          %204 = vsyncadd [#allocation6], 0
          %s205 = sshll.u32 %s4, 4
          %s206 = int_to_ptr.hbm [resolvable:$true] %s205
          %s207 = sshll.u32 [#allocation5], 4
          %s208 = int_to_ptr.vmem [resolvable:$true] %s207
          %213 = dma.hbm_to_vmem [thread:$0]  %s206, 1024, %s208, [#allocation6], 64, 64, 4
        $region28: #{tpu_custom_call.1} parent=11 // pred_fallthru
          _
        // Predicated region
        $region29: #{tpu_custom_call.1} parent=11 // pred_check
          %p214 = pneg %p150
        $region30: #{tpu_custom_call.1} parent=11 // pred_check_branch
          %216 = sbr.rel (%p214) target = $region32
        $region31: #{tpu_custom_call.1} parent=11 // pred_region
          %218 = vsyncadd [#allocation6], 0
          %s219 = sshll.u32 %s5, 4
          %s220 = int_to_ptr.hbm [resolvable:$true] %s219
          %s221 = sshll.u32 [#allocation7], 4
          %s222 = int_to_ptr.vmem [resolvable:$true] %s221
          %227 = dma.hbm_to_vmem [thread:$0]  %s220, 512, %s222, [#allocation6], 64, 64, 4
        $region32: #{tpu_custom_call.1} parent=11 // pred_fallthru
          _
      $region12: #{tpu_custom_call.1} parent=5 // pred_fallthru
        _
      %p228 = scmp.lt.s32.totalorder %s19, 2
      // Predicated region
      $region33: #{tpu_custom_call.1} parent=5 // pred_check
        %p229 = pneg %p228
      $region34: #{tpu_custom_call.1} parent=5 // pred_check_branch
        %231 = sbr.rel (%p229) target = $region36
      $region35: #{tpu_custom_call.1} parent=5 // pred_region
        // Predicated region
        $region37: #{tpu_custom_call.1} parent=35 // pred_check
          %p232 = pneg %p39
        $region38: #{tpu_custom_call.1} parent=35 // pred_check_branch
          %234 = sbr.rel (%p232) target = $region40
        $region39: #{tpu_custom_call.1} parent=35 // pred_region
          %s235 = sand.u32 %s29, 1
          %s236 = scalar_lea.sflag [#allocation3], %s235
          %s237 = sand.u32 %s29, 1
          %s238 = smul.addr %s237, 8
          %s239 = scalar_lea.vmem [#allocation2], %s238
          %241 = vsyncadd %s236, 0
          %s242 = smul.addr %s19, 8
          %s243 = scalar_lea.hbm %s0, %s242
          %s245 = sshll.u32 %s243, 4
          %s246 = int_to_ptr.hbm [resolvable:$true] %s245
          %s247 = sshll.u32 %s239, 4
          %s248 = int_to_ptr.vmem [resolvable:$true] %s247
          %250 = dma.hbm_to_vmem [thread:$0]  %s246, 128, %s248, %s236
        $region40: #{tpu_custom_call.1} parent=35 // pred_fallthru
          _
      $region36: #{tpu_custom_call.1} parent=5 // pred_fallthru
        _
      %p251 = scmp.le.s32.totalorder 1, %s19
      %p252 = scmp.lt.s32.totalorder %s19, 3
      %p253 = pnand %p251, %p252
      %p254 = pneg %p253
      // Predicated region
      $region41: #{tpu_custom_call.1} parent=5 // pred_check
        _
      $region42: #{tpu_custom_call.1} parent=5 // pred_check_branch
        %256 = sbr.rel (%p253) target = $region44
      $region43: #{tpu_custom_call.1} parent=5 // pred_region
        %s257 = ssub.s32 %s19, 1
        %s258 = sand.u32 %s32, 1
        %s259 = scalar_lea.sflag [#allocation3], %s258
        %s260 = sand.u32 %s32, 1
        %s261 = smul.addr %s260, 8
        %s262 = scalar_lea.vmem [#allocation2], %s261
        // Predicated region
        $region45: #{tpu_custom_call.1} parent=43 // pred_check
          %p263 = pneg %p45
        $region46: #{tpu_custom_call.1} parent=43 // pred_check_branch
          %265 = sbr.rel (%p263) target = $region48
        $region47: #{tpu_custom_call.1} parent=43 // pred_region
          %267 = dma.done %s259, 128
        $region48: #{tpu_custom_call.1} parent=43 // pred_fallthru
          _
        // Predicated region
        $region49: #{tpu_custom_call.1} parent=43 // pred_check
          %p268 = pneg %p129
        $region50: #{tpu_custom_call.1} parent=43 // pred_check_branch
          %270 = sbr.rel (%p268) target = $region52
        $region51: #{tpu_custom_call.1} parent=43 // pred_region
          %272 = dma.done [#allocation6], 1024
        $region52: #{tpu_custom_call.1} parent=43 // pred_fallthru
          _
        // Predicated region
        $region53: #{tpu_custom_call.1} parent=43 // pred_check
          %p273 = pneg %p150
        $region54: #{tpu_custom_call.1} parent=43 // pred_check_branch
          %275 = sbr.rel (%p273) target = $region56
        $region55: #{tpu_custom_call.1} parent=43 // pred_region
          %277 = dma.done [#allocation6], 512
        $region56: #{tpu_custom_call.1} parent=43 // pred_fallthru
          _
        %s278 = sand.u32 %s32, 1
        %s279 = scalar_lea.sflag [#allocation3], %s278
        %s280 = sand.u32 %s32, 1
        %s281 = smul.addr %s280, 8
        %s282 = scalar_lea.vmem [#allocation2], %s281
        %p283 = pneg %p45
        %p284 = pneg %p42
        %p285 = pneg %p66
        %p286 = pneg %p63
        %p287 = pneg %p87
        %p288 = pneg %p84
        %p289 = pneg %p108
        %p290 = pneg %p105
        %p291 = pneg %p129
        %p292 = pneg %p126
        %p293 = pneg %p150
        %p294 = pneg %p147
        %p295 = pneg %p176
        %p296 = pneg %p173
        %s297 = sand.u32 %s163, 1
        %s298 = scalar_lea.sflag [#allocation4], %s297
        %s299 = sand.u32 %s163, 1
        %s300 = scalar_lea.vmem [#allocation8], %s299
        %v302 = vld [vmem:[%s262] sm:$0xff]
        %v303 = vlaneseq
        %v304 = vand.u32 %v303, 127
        %v305 = vadd.f32 %v302, 0.5
        %v306 = vcvt.f32.s32.to.zero.pseudo %v305
        %307 = vset.pattern.permute.xlu0 0
        %308 = vperm.xlu0 %307, %v306
        %v309 = vpop.permute.xlu0 %308
        %vm310 = vcmp.eq.s32.totalorder %v304, %v309
        %v311 = vsel %vm310, 1, 0
        %v312 = vcvt.s32.f32 %v311
        %v313 = vadd.s32 %v306, 30
        %314 = vset.pattern.permute.xlu0 1
        %315 = vperm.xlu0 %314, %v313
        %v316 = vpop.permute.xlu0 %315
        %vm317 = vcmp.eq.s32.totalorder %v304, %v316
        %v318 = vsel %vm317, 1, 0
        %v319 = vcvt.s32.f32 %v318
        %v320 = vadd.f32 %v312, %v319
        %v321 = vadd.s32 %v306, 45
        %322 = vset.pattern.permute.xlu0 6
        %323 = vperm.xlu0 %322, %v321
        %v324 = vpop.permute.xlu0 %323
        %vm325 = vcmp.eq.s32.totalorder %v304, %v324
        %v326 = vsel %vm325, 1, 0
        %v327 = vcvt.s32.f32 %v326
        %v328 = vadd.f32 %v320, %v327
        %v329 = vadd.s32 %v306, 48
        %330 = vset.pattern.permute.xlu0 7
        %331 = vperm.xlu0 %330, %v329
        %v332 = vpop.permute.xlu0 %331
        %vm333 = vcmp.eq.s32.totalorder %v304, %v332
        %v334 = vsel %vm333, 1, 0
        %v335 = vcvt.s32.f32 %v334
        %v336 = vadd.f32 %v328, %v335
        %v337 = vadd.s32 %v306, 58
        %338 = vset.pattern.permute.xlu0 8
        %339 = vperm.xlu0 %338, %v337
        %v340 = vpop.permute.xlu0 %339
        %vm341 = vcmp.eq.s32.totalorder %v304, %v340
        %v342 = vsel %vm341, 1, 0
        %v343 = vcvt.s32.f32 %v342
        %v344 = vadd.f32 %v336, %v343
        %v345 = vadd.s32 %v306, 88
        %346 = vset.pattern.permute.xlu0 9
        %347 = vperm.xlu0 %346, %v345
        %v348 = vpop.permute.xlu0 %347
        %vm349 = vcmp.eq.s32.totalorder %v304, %v348
        %v350 = vsel %vm349, 1, 0
        %v351 = vcvt.s32.f32 %v350
        %v352 = vadd.f32 %v344, %v351
        %vm353 = vcmp.eq.s32.totalorder %v304, 41
        %355 = vset.pattern.permute.xlu0 2
        %356 = vperm.xlu0 %355, %v302
        %v357 = vpop.permute.xlu0 %356
        %v359 = vsel %vm353, %v357, 0.0
        %v360 = vadd.f32 %v352, %v359
        %vm361 = vcmp.eq.s32.totalorder %v304, 99
        %362 = vset.pattern.permute.xlu0 10
        %363 = vperm.xlu0 %362, %v302
        %v364 = vpop.permute.xlu0 %363
        %v366 = vsel %vm361, %v364, 0.0
        %v367 = vadd.f32 %v360, %v366
        %vm368 = vcmp.eq.s32.totalorder %v304, 42
        %369 = vset.pattern.permute.xlu0 3
        %370 = vperm.xlu0 %369, %v302
        %v371 = vpop.permute.xlu0 %370
        %v373 = vsel %vm368, %v371, 0.0
        %v374 = vadd.f32 %v367, %v373
        %vm375 = vcmp.eq.s32.totalorder %v304, 100
        %376 = vset.pattern.permute.xlu0 11
        %377 = vperm.xlu0 %376, %v302
        %v378 = vpop.permute.xlu0 %377
        %v380 = vsel %vm375, %v378, 0.0
        %v381 = vadd.f32 %v374, %v380
        %vm382 = vcmp.eq.s32.totalorder %v304, 43
        %383 = vset.pattern.permute.xlu0 4
        %384 = vperm.xlu0 %383, %v302
        %v385 = vpop.permute.xlu0 %384
        %v387 = vsel %vm382, %v385, 0.0
        %v388 = vadd.f32 %v381, %v387
        %vm389 = vcmp.eq.s32.totalorder %v304, 101
        %390 = vset.pattern.permute.xlu0 12
        %391 = vperm.xlu0 %390, %v302
        %v392 = vpop.permute.xlu0 %391
        %v394 = vsel %vm389, %v392, 0.0
        %v395 = vadd.f32 %v388, %v394
        %vm396 = vcmp.eq.s32.totalorder %v304, 44
        %397 = vset.pattern.permute.xlu0 5
        %398 = vperm.xlu0 %397, %v302
        %v399 = vpop.permute.xlu0 %398
        %v401 = vsel %vm396, %v399, 0.0
        %v402 = vadd.f32 %v395, %v401
        %vm403 = vcmp.eq.s32.totalorder %v304, 102
        %404 = vset.pattern.permute.xlu0 13
        %405 = vperm.xlu0 %404, %v302
        %v406 = vpop.permute.xlu0 %405
        %v408 = vsel %vm403, %v406, 0.0
        %v409 = vadd.f32 %v402, %v408
        %v410 = vpack.c.bf16 %v409, %v409
        %v411 = vld [vmem:[%s1] sm:$0xf]
        %v412 = vld [vmem:[%s1 + $0x4] sm:$0xf]
        %v413 = vld [vmem:[%s1 + $0x8] sm:$0xf]
        %v414 = vld [vmem:[%s1 + $0xc] sm:$0xf]
        %v415 = vld [vmem:[%s1 + $0x10] sm:$0xf]
        %v416 = vld [vmem:[%s1 + $0x14] sm:$0xf]
        %v417 = vld [vmem:[%s1 + $0x18] sm:$0xf]
        %v418 = vld [vmem:[%s1 + $0x1c] sm:$0xf]
        %v419 = vld [vmem:[%s1 + $0x20] sm:$0xf]
        %v420 = vld [vmem:[%s1 + $0x24] sm:$0xf]
        %v421 = vld [vmem:[%s1 + $0x28] sm:$0xf]
        %v422 = vld [vmem:[%s1 + $0x2c] sm:$0xf]
        %v423 = vld [vmem:[%s1 + $0x30] sm:$0xf]
        %v424 = vld [vmem:[%s1 + $0x34] sm:$0xf]
        %v425 = vld [vmem:[%s1 + $0x38] sm:$0xf]
        %v426 = vld [vmem:[%s1 + $0x3c] sm:$0xf]
        %v443 = vunpack.c.l.b16 %v411
        %v444 = vunpack.c.l.b16 %v412
        %v445 = vunpack.c.l.b16 %v413
        %v446 = vunpack.c.l.b16 %v414
        %v447 = vunpack.c.l.b16 %v415
        %v448 = vunpack.c.l.b16 %v416
        %v449 = vunpack.c.l.b16 %v417
        %v450 = vunpack.c.l.b16 %v418
        %v451 = vunpack.c.l.b16 %v419
        %v452 = vunpack.c.l.b16 %v420
        %v453 = vunpack.c.l.b16 %v421
        %v454 = vunpack.c.l.b16 %v422
        %v455 = vunpack.c.l.b16 %v423
        %v456 = vunpack.c.l.b16 %v424
        %v457 = vunpack.c.l.b16 %v425
        %v458 = vunpack.c.l.b16 %v426
        %v459 = vpack.c.b16 %v444, %v443
        %v460 = vpack.c.b16 %v446, %v445
        %v461 = vpack.c.b16 %v448, %v447
        %v462 = vpack.c.b16 %v450, %v449
        %v463 = vpack.c.b16 %v452, %v451
        %v464 = vpack.c.b16 %v454, %v453
        %v465 = vpack.c.b16 %v456, %v455
        %v466 = vpack.c.b16 %v458, %v457
        %475 = vmatpush.bf16.msra.mxu0 %v466
        %476 = vmatpush.bf16.msra.mxu0 %v465
        %477 = vmatpush.bf16.msra.mxu0 %v464
        %478 = vmatpush.bf16.msra.mxu0 %v463
        %479 = vmatpush.bf16.msra.mxu0 %v462
        %480 = vmatpush.bf16.msra.mxu0 %v461
        %481 = vmatpush.bf16.msra.mxu0 %v460
        %482 = vmatpush.bf16.msra.mxu0 %v459
        %483 = vmatmul.bf16.gmra.mxu0 %v410
        %v484 = vpop.f32.mrf.mxu0
        %v485 = vadd.f32 0.0, %v484
        %v486 = vpop.f32.mrf.mxu0
        %487 = vdwg.mxu0
        %v488 = vmax.f32 %v485, 0.0
        %v489 = vpack.c.bf16 %v488, %v488
        %v490 = vld [vmem:[%s2] sm:$0xf]
        %v491 = vld [vmem:[%s2 + $0x4] sm:$0xf]
        %v492 = vld [vmem:[%s2 + $0x8] sm:$0xf]
        %v493 = vld [vmem:[%s2 + $0xc] sm:$0xf]
        %v494 = vld [vmem:[%s2 + $0x10] sm:$0xf]
        %v495 = vld [vmem:[%s2 + $0x14] sm:$0xf]
        %v496 = vld [vmem:[%s2 + $0x18] sm:$0xf]
        %v497 = vld [vmem:[%s2 + $0x1c] sm:$0xf]
        %v498 = vld [vmem:[%s2 + $0x20] sm:$0xf]
        %v499 = vld [vmem:[%s2 + $0x24] sm:$0xf]
        %v500 = vld [vmem:[%s2 + $0x28] sm:$0xf]
        %v501 = vld [vmem:[%s2 + $0x2c] sm:$0xf]
        %v502 = vld [vmem:[%s2 + $0x30] sm:$0xf]
        %v503 = vld [vmem:[%s2 + $0x34] sm:$0xf]
        %v504 = vld [vmem:[%s2 + $0x38] sm:$0xf]
        %v505 = vld [vmem:[%s2 + $0x3c] sm:$0xf]
        %v506 = vld [vmem:[%s3] sm:$0xf]
        %v507 = vld [vmem:[%s3 + $0x4] sm:$0xf]
        %v508 = vld [vmem:[%s3 + $0x8] sm:$0xf]
        %v509 = vld [vmem:[%s3 + $0xc] sm:$0xf]
        %v510 = vld [vmem:[%s3 + $0x10] sm:$0xf]
        %v511 = vld [vmem:[%s3 + $0x14] sm:$0xf]
        %v512 = vld [vmem:[%s3 + $0x18] sm:$0xf]
        %v513 = vld [vmem:[%s3 + $0x1c] sm:$0xf]
        %v522 = vunpack.c.l.b16 %v506
        %v523 = vunpack.c.l.b16 %v507
        %v524 = vunpack.c.l.b16 %v508
        %v525 = vunpack.c.l.b16 %v509
        %v526 = vunpack.c.l.b16 %v510
        %v527 = vunpack.c.l.b16 %v511
        %v528 = vunpack.c.l.b16 %v512
        %v529 = vunpack.c.l.b16 %v513
        %v530 = vpack.c.b16 %v523, %v522
        %v531 = vpack.c.b16 %v525, %v524
        %v532 = vpack.c.b16 %v527, %v526
        %v533 = vpack.c.b16 %v529, %v528
        %vm538 = vcmask 523264
        %v540 = vsel %vm538, %v489, 0
        %542 = vmatpush.bf16.msra.mxu0 0
        %543 = vmatpush.bf16.msra.mxu0 0
        %544 = vmatpush.bf16.msra.mxu0 0
        %545 = vmatpush.bf16.msra.mxu0 0
        %546 = vmatpush.bf16.msra.mxu0 %v533
        %547 = vmatpush.bf16.msra.mxu0 %v532
        %548 = vmatpush.bf16.msra.mxu0 %v531
        %549 = vmatpush.bf16.msra.mxu0 %v530
        %550 = vmatmul.bf16.gmra.mxu0 %v540
        %v551 = vpop.f32.mrf.mxu0
        %v552 = vadd.f32 0.0, %v551
        %v553 = vpop.f32.mrf.mxu0
        %554 = vdwg.mxu0
        %v571 = vunpack.c.l.b16 %v490
        %v572 = vunpack.c.l.b16 %v491
        %v573 = vunpack.c.l.b16 %v492
        %v574 = vunpack.c.l.b16 %v493
        %v575 = vunpack.c.l.b16 %v494
        %v576 = vunpack.c.l.b16 %v495
        %v577 = vunpack.c.l.b16 %v496
        %v578 = vunpack.c.l.b16 %v497
        %v579 = vunpack.c.l.b16 %v498
        %v580 = vunpack.c.l.b16 %v499
        %v581 = vunpack.c.l.b16 %v500
        %v582 = vunpack.c.l.b16 %v501
        %v583 = vunpack.c.l.b16 %v502
        %v584 = vunpack.c.l.b16 %v503
        %v585 = vunpack.c.l.b16 %v504
        %v586 = vunpack.c.l.b16 %v505
        %v587 = vpack.c.b16 %v572, %v571
        %v588 = vpack.c.b16 %v574, %v573
        %v589 = vpack.c.b16 %v576, %v575
        %v590 = vpack.c.b16 %v578, %v577
        %v591 = vpack.c.b16 %v580, %v579
        %v592 = vpack.c.b16 %v582, %v581
        %v593 = vpack.c.b16 %v584, %v583
        %v594 = vpack.c.b16 %v586, %v585
        %603 = vmatpush.bf16.msra.mxu0 %v594
        %604 = vmatpush.bf16.msra.mxu0 %v593
        %605 = vmatpush.bf16.msra.mxu0 %v592
        %606 = vmatpush.bf16.msra.mxu0 %v591
        %607 = vmatpush.bf16.msra.mxu0 %v590
        %608 = vmatpush.bf16.msra.mxu0 %v589
        %609 = vmatpush.bf16.msra.mxu0 %v588
        %610 = vmatpush.bf16.msra.mxu0 %v587
        %611 = vmatmul.bf16.gmra.mxu0 %v410
        %v612 = vpop.f32.mrf.mxu0
        %v613 = vadd.f32 %v552, %v612
        %v614 = vpop.f32.mrf.mxu0
        %615 = vdwg.mxu0
        %v616 = vmax.f32 %v613, 0.0
        %v617 = vpack.c.bf16 %v616, %v616
        %v618 = vld [vmem:[#allocation5] sm:$0xf]
        %v619 = vld [vmem:[#allocation5 + $0x4] sm:$0xf]
        %v620 = vld [vmem:[#allocation5 + $0x8] sm:$0xf]
        %v621 = vld [vmem:[#allocation5 + $0xc] sm:$0xf]
        %v622 = vld [vmem:[#allocation5 + $0x10] sm:$0xf]
        %v623 = vld [vmem:[#allocation5 + $0x14] sm:$0xf]
        %v624 = vld [vmem:[#allocation5 + $0x18] sm:$0xf]
        %v625 = vld [vmem:[#allocation5 + $0x1c] sm:$0xf]
        %v626 = vld [vmem:[#allocation5 + $0x20] sm:$0xf]
        %v627 = vld [vmem:[#allocation5 + $0x24] sm:$0xf]
        %v628 = vld [vmem:[#allocation5 + $0x28] sm:$0xf]
        %v629 = vld [vmem:[#allocation5 + $0x2c] sm:$0xf]
        %v630 = vld [vmem:[#allocation5 + $0x30] sm:$0xf]
        %v631 = vld [vmem:[#allocation5 + $0x34] sm:$0xf]
        %v632 = vld [vmem:[#allocation5 + $0x38] sm:$0xf]
        %v633 = vld [vmem:[#allocation5 + $0x3c] sm:$0xf]
        %v634 = vld [vmem:[#allocation7] sm:$0xf]
        %v635 = vld [vmem:[#allocation7 + $0x4] sm:$0xf]
        %v636 = vld [vmem:[#allocation7 + $0x8] sm:$0xf]
        %v637 = vld [vmem:[#allocation7 + $0xc] sm:$0xf]
        %v638 = vld [vmem:[#allocation7 + $0x10] sm:$0xf]
        %v639 = vld [vmem:[#allocation7 + $0x14] sm:$0xf]
        %v640 = vld [vmem:[#allocation7 + $0x18] sm:$0xf]
        %v641 = vld [vmem:[#allocation7 + $0x1c] sm:$0xf]
        %v650 = vunpack.c.l.b16 %v634
        %v651 = vunpack.c.l.b16 %v635
        %v652 = vunpack.c.l.b16 %v636
        %v653 = vunpack.c.l.b16 %v637
        %v654 = vunpack.c.l.b16 %v638
        %v655 = vunpack.c.l.b16 %v639
        %v656 = vunpack.c.l.b16 %v640
        %v657 = vunpack.c.l.b16 %v641
        %v658 = vpack.c.b16 %v651, %v650
        %v659 = vpack.c.b16 %v653, %v652
        %v660 = vpack.c.b16 %v655, %v654
        %v661 = vpack.c.b16 %v657, %v656
        %666 = vmatpush.bf16.msra.mxu0 0
        %667 = vmatpush.bf16.msra.mxu0 0
        %668 = vmatpush.bf16.msra.mxu0 0
        %669 = vmatpush.bf16.msra.mxu0 0
        %670 = vmatpush.bf16.msra.mxu0 %v661
        %671 = vmatpush.bf16.msra.mxu0 %v660
        %672 = vmatpush.bf16.msra.mxu0 %v659
        %673 = vmatpush.bf16.msra.mxu0 %v658
        %674 = vmatmul.bf16.gmra.mxu0 %v540
        %v675 = vpop.f32.mrf.mxu0
        %v676 = vadd.f32 0.0, %v675
        %v677 = vpop.f32.mrf.mxu0
        %678 = vdwg.mxu0
        %v695 = vunpack.c.l.b16 %v618
        %v696 = vunpack.c.l.b16 %v619
        %v697 = vunpack.c.l.b16 %v620
        %v698 = vunpack.c.l.b16 %v621
        %v699 = vunpack.c.l.b16 %v622
        %v700 = vunpack.c.l.b16 %v623
        %v701 = vunpack.c.l.b16 %v624
        %v702 = vunpack.c.l.b16 %v625
        %v703 = vunpack.c.l.b16 %v626
        %v704 = vunpack.c.l.b16 %v627
        %v705 = vunpack.c.l.b16 %v628
        %v706 = vunpack.c.l.b16 %v629
        %v707 = vunpack.c.l.b16 %v630
        %v708 = vunpack.c.l.b16 %v631
        %v709 = vunpack.c.l.b16 %v632
        %v710 = vunpack.c.l.b16 %v633
        %v711 = vpack.c.b16 %v696, %v695
        %v712 = vpack.c.b16 %v698, %v697
        %v713 = vpack.c.b16 %v700, %v699
        %v714 = vpack.c.b16 %v702, %v701
        %v715 = vpack.c.b16 %v704, %v703
        %v716 = vpack.c.b16 %v706, %v705
        %v717 = vpack.c.b16 %v708, %v707
        %v718 = vpack.c.b16 %v710, %v709
        %727 = vmatpush.bf16.msra.mxu0 %v718
        %728 = vmatpush.bf16.msra.mxu0 %v717
        %729 = vmatpush.bf16.msra.mxu0 %v716
        %730 = vmatpush.bf16.msra.mxu0 %v715
        %731 = vmatpush.bf16.msra.mxu0 %v714
        %732 = vmatpush.bf16.msra.mxu0 %v713
        %733 = vmatpush.bf16.msra.mxu0 %v712
        %734 = vmatpush.bf16.msra.mxu0 %v711
        %735 = vmatmul.bf16.gmra.mxu0 %v617
        %v736 = vpop.f32.mrf.mxu0
        %v737 = vadd.f32 %v676, %v736
        %v738 = vpop.f32.mrf.mxu0
        %739 = vdwg.mxu0
        %v740 = vmax.f32 %v737, 0.0
        %v742 = vrot.slane %v737, 1
        %743 = vrot.lane.b32.xlu0 %v742, 112
        %v744 = vpop.permute.xlu0 %743
        %v746 = vadd.f32 %v737, %v744
        %v747 = vmax.f32 %v746, 0.0
        %v748 = vrot.slane %v737, 2
        %749 = vrot.lane.b32.xlu0 %v748, 96
        %v750 = vpop.permute.xlu0 %749
        %v752 = vadd.f32 %v746, %v750
        %v753 = vmax.f32 %v752, 0.0
        %vm754 = vcmask 130048
        %v755 = vsel %vm754, %v740, -inf
        %v756 = vrot.slane %v755, 4
        %v757 = vmax.f32 %v755, %v756
        %v758 = vrot.slane %v757, 2
        %v759 = vmax.f32 %v757, %v758
        %v760 = vrot.slane %v759, 1
        %v761 = vmax.f32 %v759, %v760
        %vm762 = vcmask 260224
        %v763 = vsel %vm762, %v747, -inf
        %v764 = vrot.slane %v763, 4
        %v765 = vmax.f32 %v763, %v764
        %v766 = vrot.slane %v765, 2
        %v767 = vmax.f32 %v765, %v766
        %v768 = vrot.slane %v767, 1
        %v769 = vmax.f32 %v767, %v768
        %vm770 = vcmask 521600
        %v771 = vsel %vm770, %v753, -inf
        %v772 = vrot.slane %v771, 4
        %v773 = vmax.f32 %v771, %v772
        %v774 = vrot.slane %v773, 2
        %v775 = vmax.f32 %v773, %v774
        %v776 = vrot.slane %v775, 1
        %v777 = vmax.f32 %v775, %v776
        %779 = vrot.lane.b32.xlu0 %v777, 112
        %v780 = vpop.permute.xlu0 %779
        %v782 = vsel %vm754, %v761, %v769
        %vm783 = vcmask 261120
        %v784 = vsel %vm783, %v782, %v780
        %vm785 = vcmask 392192
        %v786 = vsel %vm785, %v784, 0.0
        %787 = vst [vmem:[%s300] sm:$0x1] %v786
        %s788 = sand.u32 %s163, 1
        %s789 = scalar_lea.sflag [#allocation4], %s788
        %s790 = sand.u32 %s163, 1
        %s791 = scalar_lea.vmem [#allocation8], %s790
        // Predicated region
        $region57: #{tpu_custom_call.1} parent=43 // pred_check
          %p792 = pneg %p173
        $region58: #{tpu_custom_call.1} parent=43 // pred_check_branch
          %794 = sbr.rel (%p792) target = $region60
        $region59: #{tpu_custom_call.1} parent=43 // pred_region
          %796 = vsyncadd %s789, 0
          %s797 = scalar_lea.hbm %s6, %s24
          %s799 = sshll.u32 %s791, 4
          %s800 = int_to_ptr.vmem [resolvable:$true] %s799
          %s801 = sshll.u32 %s797, 4
          %s802 = int_to_ptr.hbm [resolvable:$true] %s801
          %804 = dma.vmem_to_hbm [thread:$0]  %s800, 16, %s802, %s789
        $region60: #{tpu_custom_call.1} parent=43 // pred_fallthru
          _
      $region44: #{tpu_custom_call.1} parent=5 // pred_fallthru
        _
      %p805 = scmp.le.s32.totalorder 2, %s19
      // Predicated region
      $region61: #{tpu_custom_call.1} parent=5 // pred_check
        %p806 = pneg %p805
      $region62: #{tpu_custom_call.1} parent=5 // pred_check_branch
        %808 = sbr.rel (%p806) target = $region64
      $region63: #{tpu_custom_call.1} parent=5 // pred_region
        %s809 = ssub.s32 %s19, 2
        // Predicated region
        $region65: #{tpu_custom_call.1} parent=63 // pred_check
          %p810 = pneg %p179
        $region66: #{tpu_custom_call.1} parent=63 // pred_check_branch
          %812 = sbr.rel (%p810) target = $region68
        $region67: #{tpu_custom_call.1} parent=63 // pred_region
          %s813 = sand.u32 %s164, 1
          %s814 = scalar_lea.sflag [#allocation4], %s813
          %s815 = sand.u32 %s164, 1
          %s816 = scalar_lea.vmem [#allocation8], %s815
          %818 = dma.done %s814, 16
        $region68: #{tpu_custom_call.1} parent=63 // pred_fallthru
          _
      $region64: #{tpu_custom_call.1} parent=5 // pred_fallthru
        _
    $region6: #{tpu_custom_call.1} parent=1 // loop_footer
      %s23 = sadd.s32 1, %s19
    $region7: #{tpu_custom_call.1} parent=1 // loop_footer_branch
      %18 = sbr.rel target = $region3
    $region8: #{tpu_custom_call.1} parent=1 // loop_exit
      _
    %819 = vsyncpa [#allocation3], 1
    %s820 = scalar_lea.sflag [#allocation3], 1
    %821 = vsyncpa %s820, 1
    %822 = vsyncpa [#allocation6], 1
    %823 = vsyncpa [#allocation4], 1
    %s824 = scalar_lea.sflag [#allocation4], 1
    %825 = vsyncpa %s824, 1

</llo_original>
